<compile_context>
chip_gen: v6e
topology: v6e:2x2x1
jax: 0.10.0
libtpu: 0.0.40
codegen_flags: <defaults>
</compile_context>

<pallas_src>
import functools
import math

import jax
import jax.numpy as jnp
from jax.experimental import pallas as pl
from jax.experimental.pallas import tpu as pltpu


def _round_up(x, m):
    return ((x + m - 1) // m) * m


def _chunks(total, chunk):
    """Static (start, size) chunks covering [0, total); last may be ragged."""
    out = []
    c0 = 0
    while c0 < total:
        cs = min(chunk, total - c0)
        out.append((c0, cs))
        c0 += cs
    return tuple(out)


def _siglip_mlp_kernel(x_ref, w1_ref, b1_ref, w2_ref, b2_ref, o_ref, *scratch,
                       i_chunks, compute_dtype, gelu_dtype):
    acc_ref = scratch[0] if scratch else None
    num = len(i_chunks)

    # Cast the activation tile in VMEM (VPU, nearly free) instead of paying a
    # separate HBM read+write pass in the wrapper.
    x = x_ref[...].astype(compute_dtype)

    c = math.sqrt(2.0 / math.pi)

    # Static (unrolled) loop over I-chunks:
    #   fc1-chunk (MXU) -> bias + tanh-GELU (VPU/EUP) -> fc2 partial (MXU).
    for idx, (c0, cs) in enumerate(i_chunks):
        h = jnp.dot(x, w1_ref[:, c0:c0 + cs],
                    preferred_element_type=jnp.float32)
        h = h + b1_ref[:, c0:c0 + cs]          # bias add in f32

        # tanh-GELU (matches torch gelu(approximate='tanh')):
        #   0.5*h*(1 + tanh(c*(h + 0.044715*h^3)))
        # with the cubic folded as c*h*(1 + 0.044715*h*h).
        hg = h.astype(gelu_dtype)
        inner = (c * hg) * (1.0 + 0.044715 * (hg * hg))
        g = (0.5 * hg) * (1.0 + jnp.tanh(inner))

        part = jnp.dot(g.astype(w2_ref.dtype), w2_ref[c0:c0 + cs, :],
                       preferred_element_type=jnp.float32)

        if num == 1:
            o_ref[...] = (part + b2_ref[...]).astype(o_ref.dtype)
        elif idx == 0:
            acc_ref[...] = part
        elif idx < num - 1:
            acc_ref[...] += part
        else:
            o_ref[...] = (acc_ref[...] + part + b2_ref[...]).astype(o_ref.dtype)


def siglip_mlp(x, w1, b1, w2, b2, *, tile_m=512, chunk_i=512,
               compute_dtype=jnp.bfloat16, gelu_dtype=jnp.float32):
    """SiglipMLP forward.

    x:  (B, N, H)   hidden states
    w1: (H, I), b1: (I,)   fc1 pre-transposed to "x @ W" layout
    w2: (I, H), b2: (H,)   fc2 pre-transposed to "x @ W" layout
    """
    B, N, H = x.shape
    I = w1.shape[1]
    M = B * N
    out_dtype = x.dtype

    # MXU-aligned M tile, rounded to the bf16 sublane pack (16 rows; also a
    # multiple of 8 for f32).
    pack = 16
    tm = min(int(tile_m), _round_up(M, pack))
    # v7x megacore: if the problem is big enough, guarantee >= 2 grid steps so
    # dimension_semantics=("parallel",) can spread work over both TensorCores.
    if M >= 256 and pl.cdiv(M, tm) < 2:
        tm = max(_round_up(pl.cdiv(M, 2), pack), 128)
    grid = (pl.cdiv(M, tm),)

    # Activations streamed at their HBM dtype (cast happens in VMEM); reshape
    # is a view, no extra HBM pass, and no padding (ragged last block is
    # handled by masked edge-block loads/stores).
    x2d = x.reshape(M, H)
    w1c = w1.astype(compute_dtype)
    w2c = w2.astype(compute_dtype)
    b1_2d = b1.reshape(1, I).astype(jnp.float32)
    b2_2d = b2.reshape(1, H).astype(jnp.float32)

    i_chunks = _chunks(I, min(int(chunk_i), I))
    Ic = max(cs for _, cs in i_chunks)
    multi_chunk = len(i_chunks) > 1

    xbytes = jnp.dtype(x.dtype).itemsize
    obytes = jnp.dtype(out_dtype).itemsize
    cbytes = jnp.dtype(compute_dtype).itemsize

    cost = pl.CostEstimate(
        flops=4 * M * H * I,                       # two matmuls, 2*M*K*N each
        transcendentals=M * I,                     # one tanh per fc1 activation
        bytes_accessed=(M * H * (xbytes + obytes)
                        + (H * I + I * H) * cbytes + (I + H) * 4),
    )

    # Per-generation VMEM budget (v5e/v6e: 128 MiB; v7x: 64 MiB per TC).
    try:
        vmem_cap = int(pltpu.get_tpu_info().vmem_capacity_bytes)
    except Exception:
        vmem_cap = 64 << 20

    kernel = functools.partial(_siglip_mlp_kernel, i_chunks=i_chunks,
                               compute_dtype=compute_dtype,
                               gelu_dtype=gelu_dtype)

    def run(single_buffer_resident):
        wbuf = 1 if single_buffer_resident else 2
        need = wbuf * ((H * I + I * H) * cbytes + (I + H) * 4)   # W1/W2 + biases
        need += 2 * tm * H * (xbytes + obytes)                   # x/out tiles (double-buffered)
        if multi_chunk:
            need += tm * H * 4                                   # f32 accumulator scratch
        need += tm * Ic * (4 + 4 + cbytes)                       # per-chunk intermediates
        vmem_limit = int(min(max(int(need * 1.25) + (4 << 20), 32 << 20),
                             vmem_cap - (8 << 20)))
        # TODO(synk): for very large intermediate sizes where even
        # single-buffered weights exceed ~50 MiB (v7x), tile I at the grid
        # level so only an I-chunk of W1/W2 is VMEM-resident at a time.

        res_kw = dict(pipeline_mode=pl.Buffered(1)) if single_buffer_resident else {}

        in_specs = [
            pl.BlockSpec((tm, H), lambda i: (i, 0)),              # x tile (streamed)
            pl.BlockSpec((H, I), lambda i: (0, 0), **res_kw),     # W1 (resident)
            pl.BlockSpec((1, I), lambda i: (0, 0), **res_kw),     # b1 (resident, f32)
            pl.BlockSpec((I, H), lambda i: (0, 0), **res_kw),     # W2 (resident)
            pl.BlockSpec((1, H), lambda i: (0, 0), **res_kw),     # b2 (resident, f32)
        ]
        scratch = [pltpu.VMEM((tm, H), jnp.float32)] if multi_chunk else []

        return pl.pallas_call(
            kernel,
            out_shape=jax.ShapeDtypeStruct((M, H), out_dtype),
            grid_spec=pltpu.PrefetchScalarGridSpec(
                num_scalar_prefetch=0,
                grid=grid,
                in_specs=in_specs,
                out_specs=pl.BlockSpec((tm, H), lambda i: (i, 0)),
                scratch_shapes=scratch,
            ),
            compiler_params=pltpu.CompilerParams(
                dimension_semantics=("parallel",),
                vmem_limit_bytes=vmem_limit,
            ),
            cost_estimate=cost,
        )(x2d, w1c, b1_2d, w2c, b2_2d)

    try:
        out2d = run(True)
    except Exception:
        # pl.Buffered(1) not supported by this jax build -> default buffering.
        out2d = run(False)

    return out2d.reshape(B, N, H)


if __name__ == "__main__":
    # Small config consistent with the module's forward:
    # hidden_size=32, intermediate_size=64, batch=2, num_patches=8.
    batch, num_patches, hidden_size, intermediate_size = 2, 8, 32, 64

    key = jax.random.PRNGKey(0)
    kx, kw1, kb1, kw2, kb2 = jax.random.split(key, 5)

    x = jax.random.normal(kx, (batch, num_patches, hidden_size), jnp.float32)
    # nn.Linear stores (out, in); we pre-transpose to (in, out) for x @ W.
    w1 = jax.random.normal(kw1, (hidden_size, intermediate_size), jnp.float32) * 0.02
    b1 = jax.random.normal(kb1, (intermediate_size,), jnp.float32) * 0.02
    w2 = jax.random.normal(kw2, (intermediate_size, hidden_size), jnp.float32) * 0.02
    b2 = jax.random.normal(kb2, (hidden_size,), jnp.float32) * 0.02

    def ref_mlp(xv, w1v, b1v, w2v, b2v):
        h = xv @ w1v + b1v
        h = 0.5 * h * (1.0 + jnp.tanh(
            math.sqrt(2.0 / math.pi) * (h + 0.044715 * h ** 3)))
        return h @ w2v + b2v

    ref = ref_mlp(x, w1, b1, w2, b2)

    # 1) f32 compute path: tight numerical check of the fused kernel math.
    out_f32 = siglip_mlp(x, w1, b1, w2, b2, compute_dtype=jnp.float32)
    jax.block_until_ready(out_f32)
    assert out_f32.shape == (batch, num_patches, hidden_size)
    assert jnp.allclose(out_f32, ref, atol=1e-5, rtol=1e-5)

    # 2) Default bf16-operand / f32-accumulate path (MXU-friendly): loose check.
    out_bf16 = siglip_mlp(x, w1, b1, w2, b2)
    jax.block_until_ready(out_bf16)
    assert out_bf16.shape == (batch, num_patches, hidden_size)
    assert jnp.allclose(out_bf16, ref, atol=2e-2, rtol=2e-2)

    # 3) Larger M exercising a multi-step grid and multiple I-chunks.
    B2, N2, H2, I2 = 2, 192, 128, 256
    kx2 = jax.random.fold_in(key, 1)
    x2 = jax.random.normal(kx2, (B2, N2, H2), jnp.float32)
    w1b = jax.random.normal(kw1, (H2, I2), jnp.float32) * 0.02
    b1b = jax.random.normal(kb1, (I2,), jnp.float32) * 0.02
    w2b = jax.random.normal(kw2, (I2, H2), jnp.float32) * 0.02
    b2b = jax.random.normal(kb2, (H2,), jnp.float32) * 0.02
    ref2 = ref_mlp(x2, w1b, b1b, w2b, b2b)
    out2 = siglip_mlp(x2, w1b, b1b, w2b, b2b,
                      compute_dtype=jnp.float32, chunk_i=128)
    jax.block_until_ready(out2)
    assert out2.shape == (B2, N2, H2)
    assert jnp.allclose(out2, ref2, atol=5e-3, rtol=5e-3)

    print("KERNEL_OK")
</pallas_src>

<mosaic_0001>
module attributes {stable_mosaic.version = 11 : i64} {
  func.func @_siglip_mlp_kernel(%arg0: i32, %arg1: memref<16x32xf32, #tpu.memory_space<vmem>>, %arg2: memref<32x64xf32, #tpu.memory_space<vmem>>, %arg3: memref<1x64xf32, #tpu.memory_space<vmem>>, %arg4: memref<64x32xf32, #tpu.memory_space<vmem>>, %arg5: memref<1x32xf32, #tpu.memory_space<vmem>>, %arg6: memref<16x32xf32, #tpu.memory_space<vmem>>) attributes {dimension_semantics = [#tpu.dimension_semantics<parallel>], iteration_bounds = array<i64: 1>, scalar_prefetch = 0 : i64, scratch_operands = 0 : i64, tpu.core_type = #tpu.core_type<tc>, window_params = [{transform_indices = @transform_0, window_bounds = array<i64: 16, 32>}, {pipeline_mode = #tpu.pipeline_mode<synchronous>, transform_indices = @transform_1, window_bounds = array<i64: 32, 64>}, {pipeline_mode = #tpu.pipeline_mode<synchronous>, transform_indices = @transform_2, window_bounds = array<i64: 1, 64>}, {pipeline_mode = #tpu.pipeline_mode<synchronous>, transform_indices = @transform_3, window_bounds = array<i64: 64, 32>}, {pipeline_mode = #tpu.pipeline_mode<synchronous>, transform_indices = @transform_4, window_bounds = array<i64: 1, 32>}, {transform_indices = @transform_5, window_bounds = array<i64: 16, 32>}]} {
    %c0 = arith.constant 0 : index
    %c0_0 = arith.constant 0 : index
    %0 = vector.load %arg1[%c0, %c0_0] : memref<16x32xf32, #tpu.memory_space<vmem>>, vector<16x32xf32>
    %c0_1 = arith.constant 0 : index
    %c0_2 = arith.constant 0 : index
    %1 = vector.load %arg2[%c0_1, %c0_2] : memref<32x64xf32, #tpu.memory_space<vmem>>, vector<32x64xf32>
    %cst = arith.constant dense<0.000000e+00> : vector<16x64xf32>
    %2 = tpu.matmul %0, %1, %cst {dimension_numbers = #tpu.dot_dimension_numbers<[1], [0], [0], [1], [0, 0, 1, 1], [], []>} : vector<16x32xf32>, vector<32x64xf32>, vector<16x64xf32> -> vector<16x64xf32>
    %c0_3 = arith.constant 0 : index
    %c0_4 = arith.constant 0 : index
    %3 = vector.load %arg3[%c0_3, %c0_4] : memref<1x64xf32, #tpu.memory_space<vmem>>, vector<1x64xf32>
    %4 = vector.broadcast %3 : vector<1x64xf32> to vector<16x64xf32>
    %5 = arith.addf %2, %4 : vector<16x64xf32>
    %cst_5 = arith.constant 0.797884583 : f32
    %6 = vector.broadcast %cst_5 : f32 to vector<16x64xf32>
    %7 = arith.mulf %6, %5 : vector<16x64xf32>
    %8 = arith.mulf %5, %5 : vector<16x64xf32>
    %cst_6 = arith.constant 4.471500e-02 : f32
    %9 = vector.broadcast %cst_6 : f32 to vector<16x64xf32>
    %10 = arith.mulf %9, %8 : vector<16x64xf32>
    %cst_7 = arith.constant 1.000000e+00 : f32
    %11 = vector.broadcast %cst_7 : f32 to vector<16x64xf32>
    %12 = arith.addf %11, %10 : vector<16x64xf32>
    %13 = arith.mulf %7, %12 : vector<16x64xf32>
    %cst_8 = arith.constant 5.000000e-01 : f32
    %14 = vector.broadcast %cst_8 : f32 to vector<16x64xf32>
    %15 = arith.mulf %14, %5 : vector<16x64xf32>
    %16 = math.tanh %13 : vector<16x64xf32>
    %cst_9 = arith.constant 1.000000e+00 : f32
    %17 = vector.broadcast %cst_9 : f32 to vector<16x64xf32>
    %18 = arith.addf %17, %16 : vector<16x64xf32>
    %19 = arith.mulf %15, %18 : vector<16x64xf32>
    %c0_10 = arith.constant 0 : index
    %c0_11 = arith.constant 0 : index
    %20 = vector.load %arg4[%c0_10, %c0_11] : memref<64x32xf32, #tpu.memory_space<vmem>>, vector<64x32xf32>
    %cst_12 = arith.constant dense<0.000000e+00> : vector<16x32xf32>
    %21 = tpu.matmul %19, %20, %cst_12 {dimension_numbers = #tpu.dot_dimension_numbers<[1], [0], [0], [1], [0, 0, 1, 1], [], []>} : vector<16x64xf32>, vector<64x32xf32>, vector<16x32xf32> -> vector<16x32xf32>
    %c0_13 = arith.constant 0 : index
    %c0_14 = arith.constant 0 : index
    %22 = vector.load %arg5[%c0_13, %c0_14] : memref<1x32xf32, #tpu.memory_space<vmem>>, vector<1x32xf32>
    %23 = vector.broadcast %22 : vector<1x32xf32> to vector<16x32xf32>
    %24 = arith.addf %21, %23 : vector<16x32xf32>
    %c0_15 = arith.constant 0 : index
    %c0_16 = arith.constant 0 : index
    %25 = vector.load %arg6[%c0_15, %c0_16] : memref<16x32xf32, #tpu.memory_space<vmem>>, vector<16x32xf32>
    tpu.vector_store %arg6[%c0_15, %c0_16], %24 {strides = array<i32>} : memref<16x32xf32, #tpu.memory_space<vmem>>, vector<16x32xf32>,
    return
  }
  func.func @transform_0(%arg0: i32) -> (i32, i32) {
    %c0_i32 = arith.constant 0 : i32
    %c0_i32_0 = arith.constant 0 : i32
    return %arg0, %c0_i32 : i32, i32
  }
  func.func @transform_1(%arg0: i32) -> (i32, i32) {
    %c0_i32 = arith.constant 0 : i32
    %c0_i32_0 = arith.constant 0 : i32
    %c0_i32_1 = arith.constant 0 : i32
    return %c0_i32, %c0_i32_0 : i32, i32
  }
  func.func @transform_2(%arg0: i32) -> (i32, i32) {
    %c0_i32 = arith.constant 0 : i32
    %c0_i32_0 = arith.constant 0 : i32
    %c0_i32_1 = arith.constant 0 : i32
    return %c0_i32, %c0_i32_0 : i32, i32
  }
  func.func @transform_3(%arg0: i32) -> (i32, i32) {
    %c0_i32 = arith.constant 0 : i32
    %c0_i32_0 = arith.constant 0 : i32
    %c0_i32_1 = arith.constant 0 : i32
    return %c0_i32, %c0_i32_0 : i32, i32
  }
  func.func @transform_4(%arg0: i32) -> (i32, i32) {
    %c0_i32 = arith.constant 0 : i32
    %c0_i32_0 = arith.constant 0 : i32
    %c0_i32_1 = arith.constant 0 : i32
    return %c0_i32, %c0_i32_0 : i32, i32
  }
  func.func @transform_5(%arg0: i32) -> (i32, i32) {
    %c0_i32 = arith.constant 0 : i32
    %c0_i32_0 = arith.constant 0 : i32
    return %arg0, %c0_i32 : i32, i32
  }
}

module attributes {stable_mosaic.version = 11 : i64} {
  func.func @_siglip_mlp_kernel(%arg0: i32, %arg1: memref<16x32xf32, #tpu.memory_space<vmem>>, %arg2: memref<32x64xf32, #tpu.memory_space<vmem>>, %arg3: memref<1x64xf32, #tpu.memory_space<vmem>>, %arg4: memref<64x32xf32, #tpu.memory_space<vmem>>, %arg5: memref<1x32xf32, #tpu.memory_space<vmem>>, %arg6: memref<16x32xf32, #tpu.memory_space<vmem>>) attributes {dimension_semantics = [#tpu.dimension_semantics<parallel>], iteration_bounds = array<i64: 1>, scalar_prefetch = 0 : i64, scratch_operands = 0 : i64, tpu.core_type = #tpu.core_type<tc>, window_params = [{transform_indices = @transform_0, window_bounds = array<i64: 16, 32>}, {pipeline_mode = #tpu.pipeline_mode<synchronous>, transform_indices = @transform_1, window_bounds = array<i64: 32, 64>}, {pipeline_mode = #tpu.pipeline_mode<synchronous>, transform_indices = @transform_2, window_bounds = array<i64: 1, 64>}, {pipeline_mode = #tpu.pipeline_mode<synchronous>, transform_indices = @transform_3, window_bounds = array<i64: 64, 32>}, {pipeline_mode = #tpu.pipeline_mode<synchronous>, transform_indices = @transform_4, window_bounds = array<i64: 1, 32>}, {transform_indices = @transform_5, window_bounds = array<i64: 16, 32>}]} {
    %c0 = arith.constant 0 : index
    %c0_0 = arith.constant 0 : index
    %0 = vector.load %arg1[%c0, %c0_0] : memref<16x32xf32, #tpu.memory_space<vmem>>, vector<16x32xf32>
    %c0_1 = arith.constant 0 : index
    %c0_2 = arith.constant 0 : index
    %1 = vector.load %arg2[%c0_1, %c0_2] : memref<32x64xf32, #tpu.memory_space<vmem>>, vector<32x64xf32>
    %cst = arith.constant dense<0.000000e+00> : vector<16x64xf32>
    %2 = tpu.matmul %0, %1, %cst {dimension_numbers = #tpu.dot_dimension_numbers<[1], [0], [0], [1], [0, 0, 1, 1], [], []>} : vector<16x32xf32>, vector<32x64xf32>, vector<16x64xf32> -> vector<16x64xf32>
    %c0_3 = arith.constant 0 : index
    %c0_4 = arith.constant 0 : index
    %3 = vector.load %arg3[%c0_3, %c0_4] : memref<1x64xf32, #tpu.memory_space<vmem>>, vector<1x64xf32>
    %4 = vector.broadcast %3 : vector<1x64xf32> to vector<16x64xf32>
    %5 = arith.addf %2, %4 : vector<16x64xf32>
    %cst_5 = arith.constant 0.797884583 : f32
    %6 = vector.broadcast %cst_5 : f32 to vector<16x64xf32>
    %7 = arith.mulf %6, %5 : vector<16x64xf32>
    %8 = arith.mulf %5, %5 : vector<16x64xf32>
    %cst_6 = arith.constant 4.471500e-02 : f32
    %9 = vector.broadcast %cst_6 : f32 to vector<16x64xf32>
    %10 = arith.mulf %9, %8 : vector<16x64xf32>
    %cst_7 = arith.constant 1.000000e+00 : f32
    %11 = vector.broadcast %cst_7 : f32 to vector<16x64xf32>
    %12 = arith.addf %11, %10 : vector<16x64xf32>
    %13 = arith.mulf %7, %12 : vector<16x64xf32>
    %cst_8 = arith.constant 5.000000e-01 : f32
    %14 = vector.broadcast %cst_8 : f32 to vector<16x64xf32>
    %15 = arith.mulf %14, %5 : vector<16x64xf32>
    %16 = math.tanh %13 : vector<16x64xf32>
    %cst_9 = arith.constant 1.000000e+00 : f32
    %17 = vector.broadcast %cst_9 : f32 to vector<16x64xf32>
    %18 = arith.addf %17, %16 : vector<16x64xf32>
    %19 = arith.mulf %15, %18 : vector<16x64xf32>
    %c0_10 = arith.constant 0 : index
    %c0_11 = arith.constant 0 : index
    %20 = vector.load %arg4[%c0_10, %c0_11] : memref<64x32xf32, #tpu.memory_space<vmem>>, vector<64x32xf32>
    %cst_12 = arith.constant dense<0.000000e+00> : vector<16x32xf32>
    %21 = tpu.matmul %19, %20, %cst_12 {dimension_numbers = #tpu.dot_dimension_numbers<[1], [0], [0], [1], [0, 0, 1, 1], [], []>} : vector<16x64xf32>, vector<64x32xf32>, vector<16x32xf32> -> vector<16x32xf32>
    %c0_13 = arith.constant 0 : index
    %c0_14 = arith.constant 0 : index
    %22 = vector.load %arg5[%c0_13, %c0_14] : memref<1x32xf32, #tpu.memory_space<vmem>>, vector<1x32xf32>
    %23 = vector.broadcast %22 : vector<1x32xf32> to vector<16x32xf32>
    %24 = arith.addf %21, %23 : vector<16x32xf32>
    %c0_15 = arith.constant 0 : index
    %c0_16 = arith.constant 0 : index
    %25 = vector.load %arg6[%c0_15, %c0_16] : memref<16x32xf32, #tpu.memory_space<vmem>>, vector<16x32xf32>
    tpu.vector_store %arg6[%c0_15, %c0_16], %24 {strides = array<i32>} : memref<16x32xf32, #tpu.memory_space<vmem>>, vector<16x32xf32>,
    return
  }
  func.func @transform_0(%arg0: i32) -> (i32, i32) {
    %c0_i32 = arith.constant 0 : i32
    %c0_i32_0 = arith.constant 0 : i32
    return %arg0, %c0_i32 : i32, i32
  }
  func.func @transform_1(%arg0: i32) -> (i32, i32) {
    %c0_i32 = arith.constant 0 : i32
    %c0_i32_0 = arith.constant 0 : i32
    %c0_i32_1 = arith.constant 0 : i32
    return %c0_i32, %c0_i32_0 : i32, i32
  }
  func.func @transform_2(%arg0: i32) -> (i32, i32) {
    %c0_i32 = arith.constant 0 : i32
    %c0_i32_0 = arith.constant 0 : i32
    %c0_i32_1 = arith.constant 0 : i32
    return %c0_i32, %c0_i32_0 : i32, i32
  }
  func.func @transform_3(%arg0: i32) -> (i32, i32) {
    %c0_i32 = arith.constant 0 : i32
    %c0_i32_0 = arith.constant 0 : i32
    %c0_i32_1 = arith.constant 0 : i32
    return %c0_i32, %c0_i32_0 : i32, i32
  }
  func.func @transform_4(%arg0: i32) -> (i32, i32) {
    %c0_i32 = arith.constant 0 : i32
    %c0_i32_0 = arith.constant 0 : i32
    %c0_i32_1 = arith.constant 0 : i32
    return %c0_i32, %c0_i32_0 : i32, i32
  }
  func.func @transform_5(%arg0: i32) -> (i32, i32) {
    %c0_i32 = arith.constant 0 : i32
    %c0_i32_0 = arith.constant 0 : i32
    return %arg0, %c0_i32 : i32, i32
  }
}

</mosaic_0001>

<llo_original>
// kernel: tpu_custom_call.1
$region0: #{tpu_custom_call.1}
  #allocation0 [shape = 'u32[]', space=smem, size = 0x4, offset = 0x4, fixed_abs, tag = 'smem constant byte address 0x4 - core index']
  #allocation1 [shape = 'u32[144,128]{1,0:T(1,128)}', space=vmem, size = 0x12000, scoped, tag = 'internal scratch']
  %s0 = inlined_call_operand.vmem [shape: f32[16,32], index: 0, kind: input, shape index: {}]
  %s1 = inlined_call_operand.vmem [shape: f32[32,64], index: 1, kind: input, shape index: {}]
  %s2 = inlined_call_operand.vmem [shape: f32[1,64], index: 2, kind: input, shape index: {}]
  %s3 = inlined_call_operand.vmem [shape: f32[64,32], index: 3, kind: input, shape index: {}]
  %s4 = inlined_call_operand.vmem [shape: f32[1,32], index: 4, kind: input, shape index: {}]
  %s5 = inlined_call_operand.hbm [shape: f32[16,32], index: 5, kind: output, shape index: {}]
  %s6 = sld [smem:[#allocation0]]
  $region30: #{tpu_custom_call.1} parent=0
    _
  %s8 = ssub.s32 1, %s6
  %s9 = scalar_select 0, %s8, %s6
  $region1: #{tpu_custom_call.1} parent=0
    #allocation2 [shape = 'u8[8192]{0}', space=vmem, size = 0x2000, scoped, tag = 'output window, operand 0, single buffered']
    #allocation3 [shape = 's32[1]{0}', space=sflag, size = 0x4, scoped, tag = 'scoped memory for tpu_custom_call.1']
    %10 = vsyncpa [#allocation3], 0
    // Predicated region
    $region2: #{tpu_custom_call.1} parent=1 // pred_check
      _
    $region3: #{tpu_custom_call.1} parent=1 // pred_check_branch
      %12 = sbr.rel (0) target = $region5
    $region4: #{tpu_custom_call.1} parent=1 // pred_region
      _
    $region5: #{tpu_custom_call.1} parent=1 // pred_fallthru
      _
    // Predicated region
    $region6: #{tpu_custom_call.1} parent=1 // pred_check
      _
    $region7: #{tpu_custom_call.1} parent=1 // pred_check_branch
      %14 = sbr.rel (0) target = $region9
    $region8: #{tpu_custom_call.1} parent=1 // pred_region
      _
    $region9: #{tpu_custom_call.1} parent=1 // pred_fallthru
      _
    // Predicated region
    $region10: #{tpu_custom_call.1} parent=1 // pred_check
      _
    $region11: #{tpu_custom_call.1} parent=1 // pred_check_branch
      %16 = sbr.rel (0) target = $region13
    $region12: #{tpu_custom_call.1} parent=1 // pred_region
      _
    $region13: #{tpu_custom_call.1} parent=1 // pred_fallthru
      _
    // Predicated region
    $region14: #{tpu_custom_call.1} parent=1 // pred_check
      _
    $region15: #{tpu_custom_call.1} parent=1 // pred_check_branch
      %18 = sbr.rel (0) target = $region17
    $region16: #{tpu_custom_call.1} parent=1 // pred_region
      _
    $region17: #{tpu_custom_call.1} parent=1 // pred_fallthru
      _
    // Predicated region
    $region18: #{tpu_custom_call.1} parent=1 // pred_check
      _
    $region19: #{tpu_custom_call.1} parent=1 // pred_check_branch
      %20 = sbr.rel (0) target = $region21
    $region20: #{tpu_custom_call.1} parent=1 // pred_region
      _
    $region21: #{tpu_custom_call.1} parent=1 // pred_fallthru
      _
    %v21 = vld [vmem:[%s0] sm:$0xff]
    %v22 = vld [vmem:[%s0 + $0x8] sm:$0xff]
    %v23 = vld [vmem:[%s1] sm:$0xff]
    %v24 = vld [vmem:[%s1 + $0x8] sm:$0xff]
    %v25 = vld [vmem:[%s1 + $0x10] sm:$0xff]
    %v26 = vld [vmem:[%s1 + $0x18] sm:$0xff]
    %v27 = vld [vmem:[%s2] sm:$0x1]
    %v29 = vlaneseq
    %v30 = vshrl.u32 %v29, 7
    %v31 = vsub.s32 0, %v30
    %v32 = vrot.slane %v27, %v31
    %vm34 = vcmask 261120
    %v36 = vsel %vm34, %v21, 0
    %v39 = vsel %vm34, %v22, 0
    %41 = vmatprep.subr.mxu0 0.0
    %42 = vmatpush1.msra.mxu0 0.0
    %43 = vmatprep.subr.mxu0 0.0
    %44 = vmatpush1.msra.mxu0 0.0
    %45 = vmatprep.subr.mxu0 0.0
    %46 = vmatpush1.msra.mxu0 0.0
    %47 = vmatprep.subr.mxu0 0.0
    %48 = vmatpush1.msra.mxu0 0.0
    %49 = vmatprep.subr.mxu0 0.0
    %50 = vmatpush1.msra.mxu0 0.0
    %51 = vmatprep.subr.mxu0 0.0
    %52 = vmatpush1.msra.mxu0 0.0
    %53 = vmatprep.subr.mxu0 0.0
    %54 = vmatpush1.msra.mxu0 0.0
    %55 = vmatprep.subr.mxu0 0.0
    %56 = vmatpush1.msra.mxu0 0.0
    %57 = vmatprep.subr.mxu0 0.0
    %58 = vmatpush1.msra.mxu0 0.0
    %59 = vmatprep.subr.mxu0 0.0
    %60 = vmatpush1.msra.mxu0 0.0
    %61 = vmatprep.subr.mxu0 0.0
    %62 = vmatpush1.msra.mxu0 0.0
    %63 = vmatprep.subr.mxu0 0.0
    %64 = vmatpush1.msra.mxu0 0.0
    %65 = vmatprep.subr.mxu0 0.0
    %66 = vmatpush1.msra.mxu0 %v26
    %67 = vmatprep.subr.mxu0 0.0
    %68 = vmatpush1.msra.mxu0 %v25
    %69 = vmatprep.subr.mxu0 0.0
    %70 = vmatpush1.msra.mxu0 %v24
    %71 = vmatprep.subr.mxu0 0.0
    %72 = vmatpush1.msra.mxu0 %v23
    %73 = vmatprep.subr.mxu0 0.0
    %74 = vmatpush2.msra.mxu0 0.0
    %75 = vmatprep.subr.mxu0 0.0
    %76 = vmatpush2.msra.mxu0 0.0
    %77 = vmatprep.subr.mxu0 0.0
    %78 = vmatpush2.msra.mxu0 0.0
    %79 = vmatprep.subr.mxu0 0.0
    %80 = vmatpush2.msra.mxu0 0.0
    %81 = vmatprep.subr.mxu0 0.0
    %82 = vmatpush2.msra.mxu0 0.0
    %83 = vmatprep.subr.mxu0 0.0
    %84 = vmatpush2.msra.mxu0 0.0
    %85 = vmatprep.subr.mxu0 0.0
    %86 = vmatpush2.msra.mxu0 0.0
    %87 = vmatprep.subr.mxu0 0.0
    %88 = vmatpush2.msra.mxu0 0.0
    %89 = vmatprep.subr.mxu0 0.0
    %90 = vmatpush2.msra.mxu0 0.0
    %91 = vmatprep.subr.mxu0 0.0
    %92 = vmatpush2.msra.mxu0 0.0
    %93 = vmatprep.subr.mxu0 0.0
    %94 = vmatpush2.msra.mxu0 0.0
    %95 = vmatprep.subr.mxu0 0.0
    %96 = vmatpush2.msra.mxu0 0.0
    %97 = vmatprep.subr.mxu0 0.0
    %98 = vmatpush2.msra.mxu0 0.0
    %99 = vmatprep.subr.mxu0 0.0
    %100 = vmatpush2.msra.mxu0 0.0
    %101 = vmatprep.subr.mxu0 0.0
    %102 = vmatpush2.msra.mxu0 0.0
    %103 = vmatprep.subr.mxu0 0.0
    %104 = vmatpush2.msra.mxu0 0.0
    %105 = vmatprep.mubr.f32.mxu0 0.0
    %106 = vmatmul.mubr.f32.gmra.mxu0 %v36
    %v107 = vpop.f32.mrf.mxu0
    %v108 = vadd.f32 %v32, %v107
    %v109 = vpop.f32.mrf.mxu0
    %110 = vmatprep.mubr.f32.mxu0 0.0
    %111 = vmatmul.mubr.f32.gmra.mxu0 %v39
    %v112 = vpop.f32.mrf.mxu0
    %v113 = vadd.f32 %v32, %v112
    %v114 = vpop.f32.mrf.mxu0
    %115 = vdwg.mxu0
    %v116 = vmul.f32 %v108, 0.7978846
    %v117 = vmul.f32 %v113, 0.7978846
    %v118 = vmul.f32 %v108, %v108
    %v119 = vmul.f32 %v113, %v113
    %v120 = vmul.f32 %v118, 0.044715
    %v121 = vmul.f32 %v119, 0.044715
    %v122 = vadd.f32 %v120, 1.0
    %v123 = vadd.f32 %v121, 1.0
    %v124 = vmul.f32 %v116, %v122
    %v125 = vmul.f32 %v117, %v123
    %v126 = vmul.f32 %v108, 0.5
    %v127 = vmul.f32 %v113, 0.5
    %v128 = vtanh.pop %v124
    %v129 = vtanh.pop %v125
    %v130 = vadd.f32 %v128, 1.0
    %v131 = vadd.f32 %v129, 1.0
    %v132 = vmul.f32 %v126, %v130
    %v133 = vmul.f32 %v127, %v131
    %v134 = vld [vmem:[%s3] sm:$0xff]
    %v135 = vld [vmem:[%s3 + $0x8] sm:$0xff]
    %v136 = vld [vmem:[%s3 + $0x10] sm:$0xff]
    %v137 = vld [vmem:[%s3 + $0x18] sm:$0xff]
    %v138 = vld [vmem:[%s3 + $0x20] sm:$0xff]
    %v139 = vld [vmem:[%s3 + $0x28] sm:$0xff]
    %v140 = vld [vmem:[%s3 + $0x30] sm:$0xff]
    %v141 = vld [vmem:[%s3 + $0x38] sm:$0xff]
    %v142 = vld [vmem:[%s4] sm:$0x1]
    %v144 = vlaneseq
    %v145 = vshrl.u32 %v144, 7
    %v146 = vsub.s32 0, %v145
    %v147 = vrot.slane %v142, %v146
    %vm149 = vcmask 523264
    %v151 = vsel %vm149, %v132, 0
    %v154 = vsel %vm149, %v133, 0
    %156 = vmatprep.subr.mxu0 0.0
    %157 = vmatpush1.msra.mxu0 0.0
    %158 = vmatprep.subr.mxu0 0.0
    %159 = vmatpush1.msra.mxu0 0.0
    %160 = vmatprep.subr.mxu0 0.0
    %161 = vmatpush1.msra.mxu0 0.0
    %162 = vmatprep.subr.mxu0 0.0
    %163 = vmatpush1.msra.mxu0 0.0
    %164 = vmatprep.subr.mxu0 0.0
    %165 = vmatpush1.msra.mxu0 0.0
    %166 = vmatprep.subr.mxu0 0.0
    %167 = vmatpush1.msra.mxu0 0.0
    %168 = vmatprep.subr.mxu0 0.0
    %169 = vmatpush1.msra.mxu0 0.0
    %170 = vmatprep.subr.mxu0 0.0
    %171 = vmatpush1.msra.mxu0 0.0
    %172 = vmatprep.subr.mxu0 0.0
    %173 = vmatpush1.msra.mxu0 %v141
    %174 = vmatprep.subr.mxu0 0.0
    %175 = vmatpush1.msra.mxu0 %v140
    %176 = vmatprep.subr.mxu0 0.0
    %177 = vmatpush1.msra.mxu0 %v139
    %178 = vmatprep.subr.mxu0 0.0
    %179 = vmatpush1.msra.mxu0 %v138
    %180 = vmatprep.subr.mxu0 0.0
    %181 = vmatpush1.msra.mxu0 %v137
    %182 = vmatprep.subr.mxu0 0.0
    %183 = vmatpush1.msra.mxu0 %v136
    %184 = vmatprep.subr.mxu0 0.0
    %185 = vmatpush1.msra.mxu0 %v135
    %186 = vmatprep.subr.mxu0 0.0
    %187 = vmatpush1.msra.mxu0 %v134
    %188 = vmatprep.subr.mxu0 0.0
    %189 = vmatpush2.msra.mxu0 0.0
    %190 = vmatprep.subr.mxu0 0.0
    %191 = vmatpush2.msra.mxu0 0.0
    %192 = vmatprep.subr.mxu0 0.0
    %193 = vmatpush2.msra.mxu0 0.0
    %194 = vmatprep.subr.mxu0 0.0
    %195 = vmatpush2.msra.mxu0 0.0
    %196 = vmatprep.subr.mxu0 0.0
    %197 = vmatpush2.msra.mxu0 0.0
    %198 = vmatprep.subr.mxu0 0.0
    %199 = vmatpush2.msra.mxu0 0.0
    %200 = vmatprep.subr.mxu0 0.0
    %201 = vmatpush2.msra.mxu0 0.0
    %202 = vmatprep.subr.mxu0 0.0
    %203 = vmatpush2.msra.mxu0 0.0
    %204 = vmatprep.subr.mxu0 0.0
    %205 = vmatpush2.msra.mxu0 0.0
    %206 = vmatprep.subr.mxu0 0.0
    %207 = vmatpush2.msra.mxu0 0.0
    %208 = vmatprep.subr.mxu0 0.0
    %209 = vmatpush2.msra.mxu0 0.0
    %210 = vmatprep.subr.mxu0 0.0
    %211 = vmatpush2.msra.mxu0 0.0
    %212 = vmatprep.subr.mxu0 0.0
    %213 = vmatpush2.msra.mxu0 0.0
    %214 = vmatprep.subr.mxu0 0.0
    %215 = vmatpush2.msra.mxu0 0.0
    %216 = vmatprep.subr.mxu0 0.0
    %217 = vmatpush2.msra.mxu0 0.0
    %218 = vmatprep.subr.mxu0 0.0
    %219 = vmatpush2.msra.mxu0 0.0
    %220 = vmatprep.mubr.f32.mxu0 0.0
    %221 = vmatmul.mubr.f32.gmra.mxu0 %v151
    %v222 = vpop.f32.mrf.mxu0
    %v223 = vadd.f32 %v147, %v222
    %v224 = vpop.f32.mrf.mxu0
    %225 = vmatprep.mubr.f32.mxu0 0.0
    %226 = vmatmul.mubr.f32.gmra.mxu0 %v154
    %v227 = vpop.f32.mrf.mxu0
    %v228 = vadd.f32 %v147, %v227
    %v229 = vpop.f32.mrf.mxu0
    %230 = vdwg.mxu0
    %231 = vst.msk [vmem:[#allocation2] sm:$0xff] %vm34, %v223
    %232 = vst.msk [vmem:[#allocation2 + $0x8] sm:$0xff] %vm34, %v228
    // Predicated region
    $region22: #{tpu_custom_call.1} parent=1 // pred_check
      _
    $region23: #{tpu_custom_call.1} parent=1 // pred_check_branch
      %234 = sbr.rel (0) target = $region25
    $region24: #{tpu_custom_call.1} parent=1 // pred_region
      %s236 = ssub.s32 256, 256
      %237 = vsyncadd [#allocation3], %s236
      %s238 = sshll.u32 [#allocation2], 4
      %s239 = int_to_ptr.vmem [resolvable:$true] %s238
      %244 = dma.vmem_to_hbm [thread:$0]  %s239, 256, %s5, [#allocation3], 128, 128, 8
    $region25: #{tpu_custom_call.1} parent=1 // pred_fallthru
      _
    // Predicated region
    $region26: #{tpu_custom_call.1} parent=1 // pred_check
      _
    $region27: #{tpu_custom_call.1} parent=1 // pred_check_branch
      %246 = sbr.rel (0) target = $region29
    $region28: #{tpu_custom_call.1} parent=1 // pred_region
      %247 = dma.done [#allocation3], 256
    $region29: #{tpu_custom_call.1} parent=1 // pred_fallthru
      _
    %248 = vsyncpa [#allocation3], 1

// kernel: tpu_custom_call.1
$region0: #{tpu_custom_call.1}
  #allocation0 [shape = 'u32[]', space=smem, size = 0x4, offset = 0x4, fixed_abs, tag = 'smem constant byte address 0x4 - core index']
  #allocation1 [shape = 'u32[144,128]{1,0:T(1,128)}', space=vmem, size = 0x12000, scoped, tag = 'internal scratch']
  %s0 = inlined_call_operand.vmem [shape: f32[16,32], index: 0, kind: input, shape index: {}]
  %s1 = inlined_call_operand.vmem [shape: f32[32,64], index: 1, kind: input, shape index: {}]
  %s2 = inlined_call_operand.vmem [shape: f32[1,64], index: 2, kind: input, shape index: {}]
  %s3 = inlined_call_operand.vmem [shape: f32[64,32], index: 3, kind: input, shape index: {}]
  %s4 = inlined_call_operand.vmem [shape: f32[1,32], index: 4, kind: input, shape index: {}]
  %s5 = inlined_call_operand.hbm [shape: f32[16,32], index: 5, kind: output, shape index: {}]
  %s6 = sld [smem:[#allocation0]]
  $region30: #{tpu_custom_call.1} parent=0
    _
  %s8 = ssub.s32 1, %s6
  %s9 = scalar_select 0, %s8, %s6
  $region1: #{tpu_custom_call.1} parent=0
    #allocation2 [shape = 'u8[8192]{0}', space=vmem, size = 0x2000, scoped, tag = 'output window, operand 0, single buffered']
    #allocation3 [shape = 's32[1]{0}', space=sflag, size = 0x4, scoped, tag = 'scoped memory for tpu_custom_call.1']
    %10 = vsyncpa [#allocation3], 0
    // Predicated region
    $region2: #{tpu_custom_call.1} parent=1 // pred_check
      _
    $region3: #{tpu_custom_call.1} parent=1 // pred_check_branch
      %12 = sbr.rel (0) target = $region5
    $region4: #{tpu_custom_call.1} parent=1 // pred_region
      _
    $region5: #{tpu_custom_call.1} parent=1 // pred_fallthru
      _
    // Predicated region
    $region6: #{tpu_custom_call.1} parent=1 // pred_check
      _
    $region7: #{tpu_custom_call.1} parent=1 // pred_check_branch
      %14 = sbr.rel (0) target = $region9
    $region8: #{tpu_custom_call.1} parent=1 // pred_region
      _
    $region9: #{tpu_custom_call.1} parent=1 // pred_fallthru
      _
    // Predicated region
    $region10: #{tpu_custom_call.1} parent=1 // pred_check
      _
    $region11: #{tpu_custom_call.1} parent=1 // pred_check_branch
      %16 = sbr.rel (0) target = $region13
    $region12: #{tpu_custom_call.1} parent=1 // pred_region
      _
    $region13: #{tpu_custom_call.1} parent=1 // pred_fallthru
      _
    // Predicated region
    $region14: #{tpu_custom_call.1} parent=1 // pred_check
      _
    $region15: #{tpu_custom_call.1} parent=1 // pred_check_branch
      %18 = sbr.rel (0) target = $region17
    $region16: #{tpu_custom_call.1} parent=1 // pred_region
      _
    $region17: #{tpu_custom_call.1} parent=1 // pred_fallthru
      _
    // Predicated region
    $region18: #{tpu_custom_call.1} parent=1 // pred_check
      _
    $region19: #{tpu_custom_call.1} parent=1 // pred_check_branch
      %20 = sbr.rel (0) target = $region21
    $region20: #{tpu_custom_call.1} parent=1 // pred_region
      _
    $region21: #{tpu_custom_call.1} parent=1 // pred_fallthru
      _
    %v21 = vld [vmem:[%s0] sm:$0xff]
    %v22 = vld [vmem:[%s0 + $0x8] sm:$0xff]
    %v23 = vld [vmem:[%s1] sm:$0xff]
    %v24 = vld [vmem:[%s1 + $0x8] sm:$0xff]
    %v25 = vld [vmem:[%s1 + $0x10] sm:$0xff]
    %v26 = vld [vmem:[%s1 + $0x18] sm:$0xff]
    %v27 = vld [vmem:[%s2] sm:$0x1]
    %v29 = vlaneseq
    %v30 = vshrl.u32 %v29, 7
    %v31 = vsub.s32 0, %v30
    %v32 = vrot.slane %v27, %v31
    %vm34 = vcmask 261120
    %v36 = vsel %vm34, %v21, 0
    %v39 = vsel %vm34, %v22, 0
    %41 = vmatprep.subr.mxu0 0.0
    %42 = vmatpush1.msra.mxu0 0.0
    %43 = vmatprep.subr.mxu0 0.0
    %44 = vmatpush1.msra.mxu0 0.0
    %45 = vmatprep.subr.mxu0 0.0
    %46 = vmatpush1.msra.mxu0 0.0
    %47 = vmatprep.subr.mxu0 0.0
    %48 = vmatpush1.msra.mxu0 0.0
    %49 = vmatprep.subr.mxu0 0.0
    %50 = vmatpush1.msra.mxu0 0.0
    %51 = vmatprep.subr.mxu0 0.0
    %52 = vmatpush1.msra.mxu0 0.0
    %53 = vmatprep.subr.mxu0 0.0
    %54 = vmatpush1.msra.mxu0 0.0
    %55 = vmatprep.subr.mxu0 0.0
    %56 = vmatpush1.msra.mxu0 0.0
    %57 = vmatprep.subr.mxu0 0.0
    %58 = vmatpush1.msra.mxu0 0.0
    %59 = vmatprep.subr.mxu0 0.0
    %60 = vmatpush1.msra.mxu0 0.0
    %61 = vmatprep.subr.mxu0 0.0
    %62 = vmatpush1.msra.mxu0 0.0
    %63 = vmatprep.subr.mxu0 0.0
    %64 = vmatpush1.msra.mxu0 0.0
    %65 = vmatprep.subr.mxu0 0.0
    %66 = vmatpush1.msra.mxu0 %v26
    %67 = vmatprep.subr.mxu0 0.0
    %68 = vmatpush1.msra.mxu0 %v25
    %69 = vmatprep.subr.mxu0 0.0
    %70 = vmatpush1.msra.mxu0 %v24
    %71 = vmatprep.subr.mxu0 0.0
    %72 = vmatpush1.msra.mxu0 %v23
    %73 = vmatprep.subr.mxu0 0.0
    %74 = vmatpush2.msra.mxu0 0.0
    %75 = vmatprep.subr.mxu0 0.0
    %76 = vmatpush2.msra.mxu0 0.0
    %77 = vmatprep.subr.mxu0 0.0
    %78 = vmatpush2.msra.mxu0 0.0
    %79 = vmatprep.subr.mxu0 0.0
    %80 = vmatpush2.msra.mxu0 0.0
    %81 = vmatprep.subr.mxu0 0.0
    %82 = vmatpush2.msra.mxu0 0.0
    %83 = vmatprep.subr.mxu0 0.0
    %84 = vmatpush2.msra.mxu0 0.0
    %85 = vmatprep.subr.mxu0 0.0
    %86 = vmatpush2.msra.mxu0 0.0
    %87 = vmatprep.subr.mxu0 0.0
    %88 = vmatpush2.msra.mxu0 0.0
    %89 = vmatprep.subr.mxu0 0.0
    %90 = vmatpush2.msra.mxu0 0.0
    %91 = vmatprep.subr.mxu0 0.0
    %92 = vmatpush2.msra.mxu0 0.0
    %93 = vmatprep.subr.mxu0 0.0
    %94 = vmatpush2.msra.mxu0 0.0
    %95 = vmatprep.subr.mxu0 0.0
    %96 = vmatpush2.msra.mxu0 0.0
    %97 = vmatprep.subr.mxu0 0.0
    %98 = vmatpush2.msra.mxu0 0.0
    %99 = vmatprep.subr.mxu0 0.0
    %100 = vmatpush2.msra.mxu0 0.0
    %101 = vmatprep.subr.mxu0 0.0
    %102 = vmatpush2.msra.mxu0 0.0
    %103 = vmatprep.subr.mxu0 0.0
    %104 = vmatpush2.msra.mxu0 0.0
    %105 = vmatprep.mubr.f32.mxu0 0.0
    %106 = vmatmul.mubr.f32.gmra.mxu0 %v36
    %v107 = vpop.f32.mrf.mxu0
    %v108 = vadd.f32 %v32, %v107
    %v109 = vpop.f32.mrf.mxu0
    %110 = vmatprep.mubr.f32.mxu0 0.0
    %111 = vmatmul.mubr.f32.gmra.mxu0 %v39
    %v112 = vpop.f32.mrf.mxu0
    %v113 = vadd.f32 %v32, %v112
    %v114 = vpop.f32.mrf.mxu0
    %115 = vdwg.mxu0
    %v116 = vmul.f32 %v108, 0.7978846
    %v117 = vmul.f32 %v113, 0.7978846
    %v118 = vmul.f32 %v108, %v108
    %v119 = vmul.f32 %v113, %v113
    %v120 = vmul.f32 %v118, 0.044715
    %v121 = vmul.f32 %v119, 0.044715
    %v122 = vadd.f32 %v120, 1.0
    %v123 = vadd.f32 %v121, 1.0
    %v124 = vmul.f32 %v116, %v122
    %v125 = vmul.f32 %v117, %v123
    %v126 = vmul.f32 %v108, 0.5
    %v127 = vmul.f32 %v113, 0.5
    %v128 = vtanh.pop %v124
    %v129 = vtanh.pop %v125
    %v130 = vadd.f32 %v128, 1.0
    %v131 = vadd.f32 %v129, 1.0
    %v132 = vmul.f32 %v126, %v130
    %v133 = vmul.f32 %v127, %v131
    %v134 = vld [vmem:[%s3] sm:$0xff]
    %v135 = vld [vmem:[%s3 + $0x8] sm:$0xff]
    %v136 = vld [vmem:[%s3 + $0x10] sm:$0xff]
    %v137 = vld [vmem:[%s3 + $0x18] sm:$0xff]
    %v138 = vld [vmem:[%s3 + $0x20] sm:$0xff]
    %v139 = vld [vmem:[%s3 + $0x28] sm:$0xff]
    %v140 = vld [vmem:[%s3 + $0x30] sm:$0xff]
    %v141 = vld [vmem:[%s3 + $0x38] sm:$0xff]
    %v142 = vld [vmem:[%s4] sm:$0x1]
    %v144 = vlaneseq
    %v145 = vshrl.u32 %v144, 7
    %v146 = vsub.s32 0, %v145
    %v147 = vrot.slane %v142, %v146
    %vm149 = vcmask 523264
    %v151 = vsel %vm149, %v132, 0
    %v154 = vsel %vm149, %v133, 0
    %156 = vmatprep.subr.mxu0 0.0
    %157 = vmatpush1.msra.mxu0 0.0
    %158 = vmatprep.subr.mxu0 0.0
    %159 = vmatpush1.msra.mxu0 0.0
    %160 = vmatprep.subr.mxu0 0.0
    %161 = vmatpush1.msra.mxu0 0.0
    %162 = vmatprep.subr.mxu0 0.0
    %163 = vmatpush1.msra.mxu0 0.0
    %164 = vmatprep.subr.mxu0 0.0
    %165 = vmatpush1.msra.mxu0 0.0
    %166 = vmatprep.subr.mxu0 0.0
    %167 = vmatpush1.msra.mxu0 0.0
    %168 = vmatprep.subr.mxu0 0.0
    %169 = vmatpush1.msra.mxu0 0.0
    %170 = vmatprep.subr.mxu0 0.0
    %171 = vmatpush1.msra.mxu0 0.0
    %172 = vmatprep.subr.mxu0 0.0
    %173 = vmatpush1.msra.mxu0 %v141
    %174 = vmatprep.subr.mxu0 0.0
    %175 = vmatpush1.msra.mxu0 %v140
    %176 = vmatprep.subr.mxu0 0.0
    %177 = vmatpush1.msra.mxu0 %v139
    %178 = vmatprep.subr.mxu0 0.0
    %179 = vmatpush1.msra.mxu0 %v138
    %180 = vmatprep.subr.mxu0 0.0
    %181 = vmatpush1.msra.mxu0 %v137
    %182 = vmatprep.subr.mxu0 0.0
    %183 = vmatpush1.msra.mxu0 %v136
    %184 = vmatprep.subr.mxu0 0.0
    %185 = vmatpush1.msra.mxu0 %v135
    %186 = vmatprep.subr.mxu0 0.0
    %187 = vmatpush1.msra.mxu0 %v134
    %188 = vmatprep.subr.mxu0 0.0
    %189 = vmatpush2.msra.mxu0 0.0
    %190 = vmatprep.subr.mxu0 0.0
    %191 = vmatpush2.msra.mxu0 0.0
    %192 = vmatprep.subr.mxu0 0.0
    %193 = vmatpush2.msra.mxu0 0.0
    %194 = vmatprep.subr.mxu0 0.0
    %195 = vmatpush2.msra.mxu0 0.0
    %196 = vmatprep.subr.mxu0 0.0
    %197 = vmatpush2.msra.mxu0 0.0
    %198 = vmatprep.subr.mxu0 0.0
    %199 = vmatpush2.msra.mxu0 0.0
    %200 = vmatprep.subr.mxu0 0.0
    %201 = vmatpush2.msra.mxu0 0.0
    %202 = vmatprep.subr.mxu0 0.0
    %203 = vmatpush2.msra.mxu0 0.0
    %204 = vmatprep.subr.mxu0 0.0
    %205 = vmatpush2.msra.mxu0 0.0
    %206 = vmatprep.subr.mxu0 0.0
    %207 = vmatpush2.msra.mxu0 0.0
    %208 = vmatprep.subr.mxu0 0.0
    %209 = vmatpush2.msra.mxu0 0.0
    %210 = vmatprep.subr.mxu0 0.0
    %211 = vmatpush2.msra.mxu0 0.0
    %212 = vmatprep.subr.mxu0 0.0
    %213 = vmatpush2.msra.mxu0 0.0
    %214 = vmatprep.subr.mxu0 0.0
    %215 = vmatpush2.msra.mxu0 0.0
    %216 = vmatprep.subr.mxu0 0.0
    %217 = vmatpush2.msra.mxu0 0.0
    %218 = vmatprep.subr.mxu0 0.0
    %219 = vmatpush2.msra.mxu0 0.0
    %220 = vmatprep.mubr.f32.mxu0 0.0
    %221 = vmatmul.mubr.f32.gmra.mxu0 %v151
    %v222 = vpop.f32.mrf.mxu0
    %v223 = vadd.f32 %v147, %v222
    %v224 = vpop.f32.mrf.mxu0
    %225 = vmatprep.mubr.f32.mxu0 0.0
    %226 = vmatmul.mubr.f32.gmra.mxu0 %v154
    %v227 = vpop.f32.mrf.mxu0
    %v228 = vadd.f32 %v147, %v227
    %v229 = vpop.f32.mrf.mxu0
    %230 = vdwg.mxu0
    %231 = vst.msk [vmem:[#allocation2] sm:$0xff] %vm34, %v223
    %232 = vst.msk [vmem:[#allocation2 + $0x8] sm:$0xff] %vm34, %v228
    // Predicated region
    $region22: #{tpu_custom_call.1} parent=1 // pred_check
      _
    $region23: #{tpu_custom_call.1} parent=1 // pred_check_branch
      %234 = sbr.rel (0) target = $region25
    $region24: #{tpu_custom_call.1} parent=1 // pred_region
      %s236 = ssub.s32 256, 256
      %237 = vsyncadd [#allocation3], %s236
      %s238 = sshll.u32 [#allocation2], 4
      %s239 = int_to_ptr.vmem [resolvable:$true] %s238
      %244 = dma.vmem_to_hbm [thread:$0]  %s239, 256, %s5, [#allocation3], 128, 128, 8
    $region25: #{tpu_custom_call.1} parent=1 // pred_fallthru
      _
    // Predicated region
    $region26: #{tpu_custom_call.1} parent=1 // pred_check
      _
    $region27: #{tpu_custom_call.1} parent=1 // pred_check_branch
      %246 = sbr.rel (0) target = $region29
    $region28: #{tpu_custom_call.1} parent=1 // pred_region
      %247 = dma.done [#allocation3], 256
    $region29: #{tpu_custom_call.1} parent=1 // pred_fallthru
      _
    %248 = vsyncpa [#allocation3], 1

</llo_original>
